<compile_context>
chip_gen: v7x
topology: tpu7x:2x2x1
jax: 0.10.0
libtpu: 0.0.40
codegen_flags: <defaults>
</compile_context>

<pallas_src>
import functools

import jax
import jax.numpy as jnp
from jax.experimental import pallas as pl
from jax.experimental.pallas import tpu as pltpu


def _round_up(x, m):
    return ((x + m - 1) // m) * m


# Conservative total-VMEM budget per grid step: fits inside every generation's
# default scoped-VMEM limit (v5e 16 MiB is the binding one) with headroom for
# pipeline bookkeeping and the tiny output block.
_VMEM_BUDGET_BYTES = 12 * 1024 * 1024
# Live f32 (TN, C) intermediates materialized by the kernel body (upcast,
# shifted, exp_shifted, masked-select temp) — counted in the tile budget so
# enlarging tiles never spills / OOMs on v7x's 64 MiB VMEM.
_NUM_F32_TEMPS = 4


def _default_tile_rows(n, c, itemsize):
    # Sub-32-bit dtypes pack along sublanes: use the native 16-row bf16 tile.
    align = 16 if itemsize < 4 else 8
    if n <= align:
        return n                                   # single full-extent block
    bytes_per_row = 2 * c * itemsize + _NUM_F32_TEMPS * c * 4
    rows = _VMEM_BUDGET_BYTES // max(1, bytes_per_row)
    rows = max(align, (rows // align) * align)
    # Keep >= 2 tiles so the "parallel" batch axis feeds both v7x TensorCores.
    half = _round_up(pl.cdiv(n, 2), align)
    rows = min(rows, half, _round_up(n, align))
    return int(rows)


def _focal_loss_kernel(logits_ref, targets_ref, out_ref, *,
                       alpha, gamma, n_total, tile_rows):
    pid = pl.program_id(0)

    logits = logits_ref[...].astype(jnp.float32)              # (TN, C)
    targets = targets_ref[...]                                 # (TN, 1) int32
    tn, c = logits.shape

    # Numerically stable softmax pieces; everything downstream uses `shifted`
    # so the raw-logit vregs die early.
    row_max = jnp.max(logits, axis=-1, keepdims=True)                 # (TN, 1)
    shifted = logits - row_max                                         # (TN, C)
    exp_shifted = jnp.exp(shifted)                                     # (TN, C)
    sum_exp = jnp.sum(exp_shifted, axis=-1, keepdims=True)             # (TN, 1)

    # Target-class logit via lane iota + select (no float one-hot, no second
    # (TN, C) multiply, and only one extra XLU row-reduce).
    col = jax.lax.broadcasted_iota(jnp.int32, (tn, c), 1)              # (TN, C)
    tgt_shifted = jnp.sum(jnp.where(col == targets, shifted, 0.0),
                          axis=-1, keepdims=True)                      # (TN, 1)

    # cross_entropy(reduction='none'); pt = exp(-ce) = softmax[target].
    # The per-row exp is exact f32 on the otherwise idle EUP slot.
    ce = jnp.log(sum_exp) - tgt_shifted                                # (TN, 1)
    pt = jnp.exp(-ce)                                                  # (TN, 1)

    # (1 - pt) ** gamma: integer gamma -> plain VPU multiplies (no pow/NaN
    # hazard); generic path clamps the base at 0.
    w = jnp.maximum(1.0 - pt, 0.0)
    g = float(gamma)
    if g == 0.0:
        mod = jnp.ones_like(w)
    elif g.is_integer() and g > 0:
        mod = w
        for _ in range(int(g) - 1):
            mod = mod * w
    else:
        mod = w ** g
    focal = float(alpha) * mod * ce                                    # (TN, 1)

    # Mask padded tail rows of the last tile BEFORE the sum (padded rows read
    # unspecified memory); normalization by the true N happens in the wrapper.
    row_ids = pid * tile_rows + jax.lax.broadcasted_iota(jnp.int32, (tn, 1), 0)
    focal = jnp.where(row_ids < n_total, focal, 0.0)

    partial = jnp.sum(focal)                                           # scalar
    out_ref[...] = jnp.broadcast_to(partial, out_ref.shape)            # (1, 128)


def focal_loss(logits, targets, *, alpha=1.0, gamma=2.0, tile_rows=None):
    """logits: (N, C) float (f32 or bf16); targets: (N,) int class indices.

    Returns the scalar focal loss (float32), matching the PyTorch module.
    """
    n, c = logits.shape
    itemsize = jnp.dtype(logits.dtype).itemsize
    targets2d = targets.astype(jnp.int32).reshape(n, 1)

    if tile_rows is None:
        tile_rows = _default_tile_rows(n, c, itemsize)
    assert tile_rows == n or tile_rows % 8 == 0, tile_rows
    num_tiles = int(pl.cdiv(n, tile_rows))

    kernel = functools.partial(
        _focal_loss_kernel, alpha=float(alpha), gamma=float(gamma),
        n_total=n, tile_rows=tile_rows)

    # Scheduling hint for XLA when this loss is fused into a larger step.
    cost = pl.CostEstimate(
        flops=6 * n * c,
        transcendentals=n * c + 2 * n,
        bytes_accessed=n * c * itemsize + n * 4 + num_tiles * 128 * 4,
    )

    partials = pl.pallas_call(
        kernel,
        out_shape=jax.ShapeDtypeStruct((1, num_tiles * 128), jnp.float32),
        grid=(num_tiles,),
        in_specs=[
            pl.BlockSpec((tile_rows, c), lambda i: (i, 0)),
            pl.BlockSpec((tile_rows, 1), lambda i: (i, 0)),
        ],
        # Lane-dense (1, 128) partial-sum slab per tile; every grid step owns a
        # distinct output block, so the batch axis is safely "parallel"
        # (sharded across both TensorCores on v7x, no-op on v5e/v6e).
        out_specs=pl.BlockSpec((1, 128), lambda i: (0, i)),
        compiler_params=pltpu.CompilerParams(
            dimension_semantics=("parallel",)),
        cost_estimate=cost,
    )(logits, targets2d)

    per_tile = partials.reshape(num_tiles, 128)[:, 0]
    return jnp.sum(per_tile) * jnp.float32(1.0 / n)


def _focal_loss_ref(logits, targets, *, alpha=1.0, gamma=2.0):
    """Pure-JAX reference mirroring torch.nn.functional.cross_entropy semantics."""
    logp = jax.nn.log_softmax(logits.astype(jnp.float32), axis=-1)
    ce = -jnp.take_along_axis(logp, targets[:, None].astype(jnp.int32), axis=-1)[:, 0]
    pt = jnp.exp(-ce)
    return jnp.mean(alpha * (1.0 - pt) ** gamma * ce)


if __name__ == "__main__":
    key = jax.random.PRNGKey(0)
    k_logits, k_targets = jax.random.split(key)
    N, C = 300, 32
    logits = jax.random.normal(k_logits, (N, C), dtype=jnp.float32)
    targets = jax.random.randint(k_targets, (N,), 0, C, dtype=jnp.int32)

    # f32 path, default byte-based tiling (2 tiles of 152 rows, ragged tail).
    loss = focal_loss(logits, targets, alpha=1.0, gamma=2.0)
    jax.block_until_ready(loss)
    ref = _focal_loss_ref(logits, targets, alpha=1.0, gamma=2.0)
    assert jnp.allclose(loss, ref, atol=1e-3, rtol=1e-3), (loss, ref)

    # Forced small tiles (3 tiles) to exercise pipelining + tail masking.
    loss_t = focal_loss(logits, targets, alpha=1.0, gamma=2.0, tile_rows=128)
    jax.block_until_ready(loss_t)
    assert jnp.allclose(loss_t, ref, atol=1e-3, rtol=1e-3), (loss_t, ref)

    # bf16 input path (halves HBM traffic, 16-row sublane alignment).
    logits_bf16 = logits.astype(jnp.bfloat16)
    loss_bf16 = focal_loss(logits_bf16, targets, alpha=1.0, gamma=2.0)
    jax.block_until_ready(loss_bf16)
    ref_bf16 = _focal_loss_ref(logits_bf16.astype(jnp.float32), targets,
                               alpha=1.0, gamma=2.0)
    assert jnp.allclose(loss_bf16, ref_bf16, atol=2e-3, rtol=2e-3), (loss_bf16, ref_bf16)

    print("KERNEL_OK")
</pallas_src>

<mosaic_0001>
module attributes {stable_mosaic.version = 11 : i64} {
  func.func @_focal_loss_kernel(%arg0: i32, %arg1: memref<152x32xf32, #tpu.memory_space<vmem>>, %arg2: memref<152x1xi32, #tpu.memory_space<vmem>>, %arg3: memref<1x128xf32, #tpu.memory_space<vmem>>) attributes {dimension_semantics = [#tpu.dimension_semantics<parallel>], iteration_bounds = array<i64: 2>, scalar_prefetch = 0 : i64, scratch_operands = 0 : i64, tpu.core_type = #tpu.core_type<tc>, window_params = [{transform_indices = @transform_0, window_bounds = array<i64: 152, 32>}, {transform_indices = @transform_1, window_bounds = array<i64: 152, 1>}, {transform_indices = @transform_2, window_bounds = array<i64: 1, 128>}]} {
    %c0 = arith.constant 0 : index
    %c0_0 = arith.constant 0 : index
    %0 = vector.load %arg1[%c0, %c0_0] : memref<152x32xf32, #tpu.memory_space<vmem>>, vector<152x32xf32>
    %c0_1 = arith.constant 0 : index
    %c0_2 = arith.constant 0 : index
    %1 = vector.load %arg2[%c0_1, %c0_2] : memref<152x1xi32, #tpu.memory_space<vmem>>, vector<152x1xi32>
    %cst = arith.constant dense<0xFF800000> : vector<152xf32>
    %2 = vector.multi_reduction <maximumf>, %0, %cst [1] : vector<152x32xf32> to vector<152xf32>
    %3 = vector.shape_cast %2 : vector<152xf32> to vector<152x1xf32>
    %4 = vector.broadcast %3 : vector<152x1xf32> to vector<152x32xf32>
    %5 = arith.subf %0, %4 : vector<152x32xf32>
    %6 = math.exp %5 : vector<152x32xf32>
    %cst_3 = arith.constant dense<0.000000e+00> : vector<152xf32>
    %7 = vector.multi_reduction <add>, %6, %cst_3 [1] : vector<152x32xf32> to vector<152xf32>
    %8 = vector.shape_cast %7 : vector<152xf32> to vector<152x1xf32>
    %9 = tpu.iota {dimensions = array<i32: 1>} : vector<152x32xi32>
    %10 = vector.broadcast %1 : vector<152x1xi32> to vector<152x32xi32>
    %11 = arith.cmpi eq, %9, %10 : vector<152x32xi32>
    %cst_4 = arith.constant 0.000000e+00 : f32
    %12 = vector.broadcast %cst_4 : f32 to vector<152x32xf32>
    %13 = arith.select %11, %5, %12 : vector<152x32xi1>, vector<152x32xf32>
    %cst_5 = arith.constant dense<0.000000e+00> : vector<152xf32>
    %14 = vector.multi_reduction <add>, %13, %cst_5 [1] : vector<152x32xf32> to vector<152xf32>
    %15 = vector.shape_cast %14 : vector<152xf32> to vector<152x1xf32>
    %16 = math.log %8 : vector<152x1xf32>
    %17 = arith.subf %16, %15 : vector<152x1xf32>
    %cst_6 = arith.constant 0.000000e+00 : f32
    %18 = vector.broadcast %cst_6 : f32 to vector<152x1xf32>
    %19 = arith.subf %18, %17 : vector<152x1xf32>
    %20 = math.exp %19 : vector<152x1xf32>
    %cst_7 = arith.constant 1.000000e+00 : f32
    %21 = vector.broadcast %cst_7 : f32 to vector<152x1xf32>
    %22 = arith.subf %21, %20 : vector<152x1xf32>
    %cst_8 = arith.constant 0.000000e+00 : f32
    %23 = vector.broadcast %cst_8 : f32 to vector<152x1xf32>
    %24 = arith.maximumf %22, %23 : vector<152x1xf32>
    %25 = arith.mulf %24, %24 : vector<152x1xf32>
    %cst_9 = arith.constant 1.000000e+00 : f32
    %26 = vector.broadcast %cst_9 : f32 to vector<152x1xf32>
    %27 = arith.mulf %26, %25 : vector<152x1xf32>
    %28 = arith.mulf %27, %17 : vector<152x1xf32>
    %c152_i32 = arith.constant 152 : i32
    %29 = arith.muli %arg0, %c152_i32 : i32
    %30 = tpu.iota {dimensions = array<i32: 0>} : vector<152x1xi32>
    %31 = vector.broadcast %29 : i32 to vector<152x1xi32>
    %32 = arith.addi %31, %30 : vector<152x1xi32>
    %c300_i32 = arith.constant 300 : i32
    %33 = vector.broadcast %c300_i32 : i32 to vector<152x1xi32>
    %34 = arith.cmpi slt, %32, %33 : vector<152x1xi32>
    %cst_10 = arith.constant 0.000000e+00 : f32
    %35 = vector.broadcast %cst_10 : f32 to vector<152x1xf32>
    %36 = arith.select %34, %28, %35 : vector<152x1xi1>, vector<152x1xf32>
    %37 = vector.shape_cast %36 : vector<152x1xf32> to vector<1x152x1xf32>
    %cst_11 = arith.constant dense<0.000000e+00> : vector<1xf32>
    %38 = vector.multi_reduction <add>, %37, %cst_11 [1, 2] : vector<1x152x1xf32> to vector<1xf32>
    %39 = vector.shape_cast %38 : vector<1xf32> to vector<1x1x1xf32>
    %40 = vector.extract %39[0, 0, 0] : f32 from vector<1x1x1xf32>
    %41 = vector.broadcast %40 : f32 to vector<1x128xf32>
    %c0_12 = arith.constant 0 : index
    %c0_13 = arith.constant 0 : index
    %42 = vector.load %arg3[%c0_12, %c0_13] : memref<1x128xf32, #tpu.memory_space<vmem>>, vector<1x128xf32>
    tpu.vector_store %arg3[%c0_12, %c0_13], %41 {strides = array<i32>} : memref<1x128xf32, #tpu.memory_space<vmem>>, vector<1x128xf32>,
    return
  }
  func.func @transform_0(%arg0: i32) -> (i32, i32) {
    %c0_i32 = arith.constant 0 : i32
    %c0_i32_0 = arith.constant 0 : i32
    return %arg0, %c0_i32 : i32, i32
  }
  func.func @transform_1(%arg0: i32) -> (i32, i32) {
    %c0_i32 = arith.constant 0 : i32
    %c0_i32_0 = arith.constant 0 : i32
    return %arg0, %c0_i32 : i32, i32
  }
  func.func @transform_2(%arg0: i32) -> (i32, i32) {
    %c0_i32 = arith.constant 0 : i32
    %c0_i32_0 = arith.constant 0 : i32
    return %c0_i32, %arg0 : i32, i32
  }
}

</mosaic_0001>

<llo_original>
// kernel: tpu_custom_call.1
$region0: #{tpu_custom_call.1}
  #allocation0 [shape = 'u32[]', space=smem, size = 0x4, offset = 0x4, fixed_abs, tag = 'smem constant byte address 0x4 - core index']
  #allocation1 [shape = 'u32[144,128]{1,0:T(1,128)}', space=vmem, size = 0x12000, scoped, tag = 'internal scratch']
  %s0 = inlined_call_operand.vmem [shape: f32[300,32], index: 0, kind: input, shape index: {}]
  %s1 = inlined_call_operand.vmem [shape: s32[300,1], index: 1, kind: input, shape index: {}]
  %s2 = inlined_call_operand.hbm [shape: f32[1,256], index: 2, kind: output, shape index: {}]
  %s3 = sld [smem:[#allocation0]]
  $region41: #{tpu_custom_call.1} parent=0
    _
  %s5 = ssub.s32 1, %s3
  %s6 = scalar_select 0, %s5, %s3
  $region1: #{tpu_custom_call.1} parent=0
    #allocation2 [shape = 'u8[1024]{0}', space=vmem, size = 0x400, scoped, tag = 'output window, operand 0']
    #allocation3 [shape = 's32[2]{0}', space=sflag, size = 0x8, scoped, tag = 'scoped memory for tpu_custom_call.1']
    %7 = vsyncpa [#allocation3], 0
    %s8 = scalar_lea.sflag [#allocation3], 1
    %9 = vsyncpa %s8, 0
    loop: start=0, step=1, limit=4
    $region2: #{tpu_custom_call.1} parent=1 // loop_pre_header
      _
    $region3: #{tpu_custom_call.1} parent=1 // loop_header
      %s11 = sphi 0, %s15
      %p12 = scmp.ge.s32.totalorder %s11, 4
      %s21 = sphi 0, %s23
      %s24 = sphi 0, %s21
      %s25 = sphi 0, %s24
      %s41 = sphi 0, %s25
      %s47 = sphi 0, %s49
      %s50 = sphi 0, %s47
      %s51 = sphi 0, %s50
      %s67 = sphi 0, %s51
      %s73 = sphi 0, %s75
      %s76 = sphi 0, %s73
      %s77 = sphi 0, %s76
      %s93 = sphi 0, %s77
    $region4: #{tpu_custom_call.1} parent=1 // loop_header_branch
      %14 = sbr.rel (%p12) target = $region8
    $region5: #{tpu_custom_call.1} parent=1 // loop_body
      %s16 = ssub.s32 %s11, 1
      %s17 = ssub.s32 %s11, 2
      %s18 = sadd.s32 %s11, 1
      %s19 = ssub.s32 %s11, %s18
      %p20 = scmp.eq.s32.totalorder %s19, 0
      %s22 = sadd.s32 %s21, 1
      %s23 = scalar_select %p20, %s21, %s22
      %p26 = pneg %p20
      %p27 = scmp.eq.s32.totalorder %s11, 1
      %p28 = por %p26, %p27
      %p29 = scmp.ne.s32.totalorder %s21, %s24
      %p30 = scmp.eq.s32.totalorder %s11, 0
      %p31 = por %p29, %p30
      %p32 = scmp.ne.s32.totalorder %s21, %s24
      %p33 = scmp.eq.s32.totalorder %s16, 1
      %p34 = por %p32, %p33
      %p35 = scmp.ne.s32.totalorder %s24, %s25
      %p36 = scmp.eq.s32.totalorder %s16, 0
      %p37 = por %p35, %p36
      %p38 = scmp.ne.s32.totalorder %s24, %s25
      %p39 = scmp.eq.s32.totalorder %s17, 1
      %p40 = por %p38, %p39
      %p42 = scmp.ne.s32.totalorder %s25, %s41
      %p43 = scmp.eq.s32.totalorder %s17, 0
      %p44 = por %p42, %p43
      %s45 = ssub.s32 %s11, %s18
      %p46 = scmp.eq.s32.totalorder %s45, 0
      %s48 = sadd.s32 %s47, 1
      %s49 = scalar_select %p46, %s47, %s48
      %p52 = pneg %p46
      %p53 = scmp.eq.s32.totalorder %s11, 1
      %p54 = por %p52, %p53
      %p55 = scmp.ne.s32.totalorder %s47, %s50
      %p56 = scmp.eq.s32.totalorder %s11, 0
      %p57 = por %p55, %p56
      %p58 = scmp.ne.s32.totalorder %s47, %s50
      %p59 = scmp.eq.s32.totalorder %s16, 1
      %p60 = por %p58, %p59
      %p61 = scmp.ne.s32.totalorder %s50, %s51
      %p62 = scmp.eq.s32.totalorder %s16, 0
      %p63 = por %p61, %p62
      %p64 = scmp.ne.s32.totalorder %s50, %s51
      %p65 = scmp.eq.s32.totalorder %s17, 1
      %p66 = por %p64, %p65
      %p68 = scmp.ne.s32.totalorder %s51, %s67
      %p69 = scmp.eq.s32.totalorder %s17, 0
      %p70 = por %p68, %p69
      %s71 = ssub.s32 %s11, %s18
      %p72 = scmp.eq.s32.totalorder %s71, 0
      %s74 = sadd.s32 %s73, 1
      %s75 = scalar_select %p72, %s73, %s74
      %p78 = pneg %p72
      %p79 = scmp.eq.s32.totalorder %s11, 1
      %p80 = por %p78, %p79
      %p81 = scmp.ne.s32.totalorder %s73, %s76
      %p82 = scmp.eq.s32.totalorder %s11, 0
      %p83 = por %p81, %p82
      %p84 = scmp.ne.s32.totalorder %s73, %s76
      %p85 = scmp.eq.s32.totalorder %s16, 1
      %p86 = por %p84, %p85
      %p87 = scmp.ne.s32.totalorder %s76, %s77
      %p88 = scmp.eq.s32.totalorder %s16, 0
      %p89 = por %p87, %p88
      %p90 = scmp.ne.s32.totalorder %s76, %s77
      %p91 = scmp.eq.s32.totalorder %s17, 1
      %p92 = por %p90, %p91
      %p94 = scmp.ne.s32.totalorder %s77, %s93
      %p95 = scmp.eq.s32.totalorder %s17, 0
      %p96 = por %p94, %p95
      %p97 = scmp.le.s32.totalorder 1, %s11
      %p98 = scmp.lt.s32.totalorder %s11, 3
      %p99 = pnand %p97, %p98
      %p100 = pneg %p99
      // Predicated region
      $region9: #{tpu_custom_call.1} parent=5 // pred_check
        _
      $region10: #{tpu_custom_call.1} parent=5 // pred_check_branch
        %102 = sbr.rel (%p99) target = $region12
      $region11: #{tpu_custom_call.1} parent=5 // pred_region
        %s103 = ssub.s32 %s11, 1
      $region12: #{tpu_custom_call.1} parent=5 // pred_fallthru
        _
      %p104 = scmp.lt.s32.totalorder %s11, 2
      // Predicated region
      $region13: #{tpu_custom_call.1} parent=5 // pred_check
        %p105 = pneg %p104
      $region14: #{tpu_custom_call.1} parent=5 // pred_check_branch
        %107 = sbr.rel (%p105) target = $region16
      $region15: #{tpu_custom_call.1} parent=5 // pred_region
        // Predicated region
        $region17: #{tpu_custom_call.1} parent=15 // pred_check
          %p108 = pneg %p31
        $region18: #{tpu_custom_call.1} parent=15 // pred_check_branch
          %110 = sbr.rel (%p108) target = $region20
        $region19: #{tpu_custom_call.1} parent=15 // pred_region
          %s111 = smul.u32 19, %s11
          %p112 = scmp.lt.s32.totalorder %s111, 37
          %s113 = scalar_select %p112, %s111, 37
          %s114 = smul.addr %s113, 8
          %s115 = scalar_lea.vmem %s0, %s114
          %s116 = smul.u32 19, %s11
        $region20: #{tpu_custom_call.1} parent=15 // pred_fallthru
          _
        // Predicated region
        $region21: #{tpu_custom_call.1} parent=15 // pred_check
          %p117 = pneg %p57
        $region22: #{tpu_custom_call.1} parent=15 // pred_check_branch
          %119 = sbr.rel (%p117) target = $region24
        $region23: #{tpu_custom_call.1} parent=15 // pred_region
          %s120 = smul.u32 19, %s11
          %p121 = scmp.lt.s32.totalorder %s120, 37
          %s122 = scalar_select %p121, %s120, 37
          %s123 = smul.addr %s122, 8
          %s124 = scalar_lea.vmem %s1, %s123
          %s125 = smul.u32 19, %s11
        $region24: #{tpu_custom_call.1} parent=15 // pred_fallthru
          _
      $region16: #{tpu_custom_call.1} parent=5 // pred_fallthru
        _
      %p126 = scmp.le.s32.totalorder 1, %s11
      %p127 = scmp.lt.s32.totalorder %s11, 3
      %p128 = pnand %p126, %p127
      %p129 = pneg %p128
      // Predicated region
      $region25: #{tpu_custom_call.1} parent=5 // pred_check
        _
      $region26: #{tpu_custom_call.1} parent=5 // pred_check_branch
        %131 = sbr.rel (%p128) target = $region28
      $region27: #{tpu_custom_call.1} parent=5 // pred_region
        %s132 = ssub.s32 %s11, 1
        %s133 = smul.u32 19, %s16
        %p134 = scmp.lt.s32.totalorder %s133, 37
        %s135 = scalar_select %p134, %s133, 37
        %s136 = smul.addr %s135, 8
        %s137 = scalar_lea.vmem %s0, %s136
        %p138 = pneg %p37
        %p139 = pneg %p34
        %s140 = smul.u32 19, %s16
        %p141 = scmp.lt.s32.totalorder %s140, 37
        %s142 = scalar_select %p141, %s140, 37
        %s143 = smul.addr %s142, 8
        %s144 = scalar_lea.vmem %s1, %s143
        %p145 = pneg %p63
        %p146 = pneg %p60
        %p147 = pneg %p89
        %p148 = pneg %p86
        %s149 = sand.u32 %s76, 1
        %s150 = scalar_lea.sflag [#allocation3], %s149
        %s151 = sand.u32 %s76, 1
        %s152 = scalar_lea.vmem [#allocation2], %s151
        %s153 = smul.u32 19, %s16
        %p154 = scmp.lt.s32.totalorder %s153, 37
        %s155 = scalar_select %p154, %s153, 37
        %s156 = smul.addr %s155, 8
        %s157 = scalar_lea.vmem %s0, %s156
        %s158 = smul.u32 19, %s16
        %s159 = smul.u32 19, %s16
        %p160 = scmp.lt.s32.totalorder %s159, 37
        %s161 = scalar_select %p160, %s159, 37
        %s162 = smul.addr %s161, 8
        %s163 = scalar_lea.vmem %s1, %s162
        %s164 = smul.u32 19, %s16
        %v165 = vld [vmem:[%s157] sm:$0xff]
        %v166 = vld [vmem:[%s157 + $0x8] sm:$0xff]
        %v167 = vld [vmem:[%s157 + $0x10] sm:$0xff]
        %v168 = vld [vmem:[%s157 + $0x18] sm:$0xff]
        %v169 = vld [vmem:[%s157 + $0x20] sm:$0xff]
        %v170 = vld [vmem:[%s157 + $0x28] sm:$0xff]
        %v171 = vld [vmem:[%s157 + $0x30] sm:$0xff]
        %v172 = vld [vmem:[%s157 + $0x38] sm:$0xff]
        %v173 = vld [vmem:[%s157 + $0x40] sm:$0xff]
        %v174 = vld [vmem:[%s157 + $0x48] sm:$0xff]
        %v175 = vld [vmem:[%s157 + $0x50] sm:$0xff]
        %v176 = vld [vmem:[%s157 + $0x58] sm:$0xff]
        %v177 = vld [vmem:[%s157 + $0x60] sm:$0xff]
        %v178 = vld [vmem:[%s157 + $0x68] sm:$0xff]
        %v179 = vld [vmem:[%s157 + $0x70] sm:$0xff]
        %v180 = vld [vmem:[%s157 + $0x78] sm:$0xff]
        %v181 = vld [vmem:[%s157 + $0x80] sm:$0xff]
        %v182 = vld [vmem:[%s157 + $0x88] sm:$0xff]
        %v183 = vld [vmem:[%s157 + $0x90] sm:$0xff]
        %v184 = vld [vmem:[%s163] sm:$0xff]
        %v185 = vld [vmem:[%s163 + $0x8] sm:$0xff]
        %v186 = vld [vmem:[%s163 + $0x10] sm:$0xff]
        %v187 = vld [vmem:[%s163 + $0x18] sm:$0xff]
        %v188 = vld [vmem:[%s163 + $0x20] sm:$0xff]
        %v189 = vld [vmem:[%s163 + $0x28] sm:$0xff]
        %v190 = vld [vmem:[%s163 + $0x30] sm:$0xff]
        %v191 = vld [vmem:[%s163 + $0x38] sm:$0xff]
        %v192 = vld [vmem:[%s163 + $0x40] sm:$0xff]
        %v193 = vld [vmem:[%s163 + $0x48] sm:$0xff]
        %v194 = vld [vmem:[%s163 + $0x50] sm:$0xff]
        %v195 = vld [vmem:[%s163 + $0x58] sm:$0xff]
        %v196 = vld [vmem:[%s163 + $0x60] sm:$0xff]
        %v197 = vld [vmem:[%s163 + $0x68] sm:$0xff]
        %v198 = vld [vmem:[%s163 + $0x70] sm:$0xff]
        %v199 = vld [vmem:[%s163 + $0x78] sm:$0xff]
        %v200 = vld [vmem:[%s163 + $0x80] sm:$0xff]
        %v201 = vld [vmem:[%s163 + $0x88] sm:$0xff]
        %v202 = vld [vmem:[%s163 + $0x90] sm:$0xff]
        %vm203 = vcmask 261120
        %v204 = vsel %vm203, %v165, -inf
        %205 = vmax.xlane.f32.xlu0 %v204
        %v206 = vpop.xlane.xlu0 %205
        %v207 = vsel %vm203, %v166, -inf
        %208 = vmax.xlane.f32.xlu0 %v207
        %v209 = vpop.xlane.xlu0 %208
        %v210 = vsel %vm203, %v167, -inf
        %211 = vmax.xlane.f32.xlu0 %v210
        %v212 = vpop.xlane.xlu0 %211
        %v213 = vsel %vm203, %v168, -inf
        %214 = vmax.xlane.f32.xlu0 %v213
        %v215 = vpop.xlane.xlu0 %214
        %v216 = vsel %vm203, %v169, -inf
        %217 = vmax.xlane.f32.xlu0 %v216
        %v218 = vpop.xlane.xlu0 %217
        %v219 = vsel %vm203, %v170, -inf
        %220 = vmax.xlane.f32.xlu0 %v219
        %v221 = vpop.xlane.xlu0 %220
        %v222 = vsel %vm203, %v171, -inf
        %223 = vmax.xlane.f32.xlu0 %v222
        %v224 = vpop.xlane.xlu0 %223
        %v225 = vsel %vm203, %v172, -inf
        %226 = vmax.xlane.f32.xlu0 %v225
        %v227 = vpop.xlane.xlu0 %226
        %v228 = vsel %vm203, %v173, -inf
        %229 = vmax.xlane.f32.xlu0 %v228
        %v230 = vpop.xlane.xlu0 %229
        %v231 = vsel %vm203, %v174, -inf
        %232 = vmax.xlane.f32.xlu0 %v231
        %v233 = vpop.xlane.xlu0 %232
        %v234 = vsel %vm203, %v175, -inf
        %235 = vmax.xlane.f32.xlu0 %v234
        %v236 = vpop.xlane.xlu0 %235
        %v237 = vsel %vm203, %v176, -inf
        %238 = vmax.xlane.f32.xlu0 %v237
        %v239 = vpop.xlane.xlu0 %238
        %v240 = vsel %vm203, %v177, -inf
        %241 = vmax.xlane.f32.xlu0 %v240
        %v242 = vpop.xlane.xlu0 %241
        %v243 = vsel %vm203, %v178, -inf
        %244 = vmax.xlane.f32.xlu0 %v243
        %v245 = vpop.xlane.xlu0 %244
        %v246 = vsel %vm203, %v179, -inf
        %247 = vmax.xlane.f32.xlu0 %v246
        %v248 = vpop.xlane.xlu0 %247
        %v249 = vsel %vm203, %v180, -inf
        %250 = vmax.xlane.f32.xlu0 %v249
        %v251 = vpop.xlane.xlu0 %250
        %v252 = vsel %vm203, %v181, -inf
        %253 = vmax.xlane.f32.xlu0 %v252
        %v254 = vpop.xlane.xlu0 %253
        %v255 = vsel %vm203, %v182, -inf
        %256 = vmax.xlane.f32.xlu0 %v255
        %v257 = vpop.xlane.xlu0 %256
        %v258 = vsel %vm203, %v183, -inf
        %259 = vmax.xlane.f32.xlu0 %v258
        %v260 = vpop.xlane.xlu0 %259
        %v261 = vsub.f32 %v165, %v206
        %v262 = vsub.f32 %v166, %v209
        %v263 = vsub.f32 %v167, %v212
        %v264 = vsub.f32 %v168, %v215
        %v265 = vsub.f32 %v169, %v218
        %v266 = vsub.f32 %v170, %v221
        %v267 = vsub.f32 %v171, %v224
        %v268 = vsub.f32 %v172, %v227
        %v269 = vsub.f32 %v173, %v230
        %v270 = vsub.f32 %v174, %v233
        %v271 = vsub.f32 %v175, %v236
        %v272 = vsub.f32 %v176, %v239
        %v273 = vsub.f32 %v177, %v242
        %v274 = vsub.f32 %v178, %v245
        %v275 = vsub.f32 %v179, %v248
        %v276 = vsub.f32 %v180, %v251
        %v277 = vsub.f32 %v181, %v254
        %v278 = vsub.f32 %v182, %v257
        %v279 = vsub.f32 %v183, %v260
        %v280 = vmul.f32 %v261, 1.442695
        %v281 = vpow.pop %v280
        %v282 = vmul.f32 %v262, 1.442695
        %v283 = vpow.pop %v282
        %v284 = vmul.f32 %v263, 1.442695
        %v285 = vpow.pop %v284
        %v286 = vmul.f32 %v264, 1.442695
        %v287 = vpow.pop %v286
        %v288 = vmul.f32 %v265, 1.442695
        %v289 = vpow.pop %v288
        %v290 = vmul.f32 %v266, 1.442695
        %v291 = vpow.pop %v290
        %v292 = vmul.f32 %v267, 1.442695
        %v293 = vpow.pop %v292
        %v294 = vmul.f32 %v268, 1.442695
        %v295 = vpow.pop %v294
        %v296 = vmul.f32 %v269, 1.442695
        %v297 = vpow.pop %v296
        %v298 = vmul.f32 %v270, 1.442695
        %v299 = vpow.pop %v298
        %v300 = vmul.f32 %v271, 1.442695
        %v301 = vpow.pop %v300
        %v302 = vmul.f32 %v272, 1.442695
        %v303 = vpow.pop %v302
        %v304 = vmul.f32 %v273, 1.442695
        %v305 = vpow.pop %v304
        %v306 = vmul.f32 %v274, 1.442695
        %v307 = vpow.pop %v306
        %v308 = vmul.f32 %v275, 1.442695
        %v309 = vpow.pop %v308
        %v310 = vmul.f32 %v276, 1.442695
        %v311 = vpow.pop %v310
        %v312 = vmul.f32 %v277, 1.442695
        %v313 = vpow.pop %v312
        %v314 = vmul.f32 %v278, 1.442695
        %v315 = vpow.pop %v314
        %v316 = vmul.f32 %v279, 1.442695
        %v317 = vpow.pop %v316
        %v318 = vsel %vm203, %v281, 0.0
        %319 = vadd.xlane.f32.xlu0 %v318
        %v320 = vpop.xlane.xlu0 %319
        %v321 = vsel %vm203, %v283, 0.0
        %322 = vadd.xlane.f32.xlu0 %v321
        %v323 = vpop.xlane.xlu0 %322
        %v324 = vsel %vm203, %v285, 0.0
        %325 = vadd.xlane.f32.xlu0 %v324
        %v326 = vpop.xlane.xlu0 %325
        %v327 = vsel %vm203, %v287, 0.0
        %328 = vadd.xlane.f32.xlu0 %v327
        %v329 = vpop.xlane.xlu0 %328
        %v330 = vsel %vm203, %v289, 0.0
        %331 = vadd.xlane.f32.xlu0 %v330
        %v332 = vpop.xlane.xlu0 %331
        %v333 = vsel %vm203, %v291, 0.0
        %334 = vadd.xlane.f32.xlu0 %v333
        %v335 = vpop.xlane.xlu0 %334
        %v336 = vsel %vm203, %v293, 0.0
        %337 = vadd.xlane.f32.xlu0 %v336
        %v338 = vpop.xlane.xlu0 %337
        %v339 = vsel %vm203, %v295, 0.0
        %340 = vadd.xlane.f32.xlu0 %v339
        %v341 = vpop.xlane.xlu0 %340
        %v342 = vsel %vm203, %v297, 0.0
        %343 = vadd.xlane.f32.xlu0 %v342
        %v344 = vpop.xlane.xlu0 %343
        %v345 = vsel %vm203, %v299, 0.0
        %346 = vadd.xlane.f32.xlu0 %v345
        %v347 = vpop.xlane.xlu0 %346
        %v348 = vsel %vm203, %v301, 0.0
        %349 = vadd.xlane.f32.xlu0 %v348
        %v350 = vpop.xlane.xlu0 %349
        %v351 = vsel %vm203, %v303, 0.0
        %352 = vadd.xlane.f32.xlu0 %v351
        %v353 = vpop.xlane.xlu0 %352
        %v354 = vsel %vm203, %v305, 0.0
        %355 = vadd.xlane.f32.xlu0 %v354
        %v356 = vpop.xlane.xlu0 %355
        %v357 = vsel %vm203, %v307, 0.0
        %358 = vadd.xlane.f32.xlu0 %v357
        %v359 = vpop.xlane.xlu0 %358
        %v360 = vsel %vm203, %v309, 0.0
        %361 = vadd.xlane.f32.xlu0 %v360
        %v362 = vpop.xlane.xlu0 %361
        %v363 = vsel %vm203, %v311, 0.0
        %364 = vadd.xlane.f32.xlu0 %v363
        %v365 = vpop.xlane.xlu0 %364
        %v366 = vsel %vm203, %v313, 0.0
        %367 = vadd.xlane.f32.xlu0 %v366
        %v368 = vpop.xlane.xlu0 %367
        %v369 = vsel %vm203, %v315, 0.0
        %370 = vadd.xlane.f32.xlu0 %v369
        %v371 = vpop.xlane.xlu0 %370
        %v372 = vsel %vm203, %v317, 0.0
        %373 = vadd.xlane.f32.xlu0 %v372
        %v374 = vpop.xlane.xlu0 %373
        %v375 = vlaneseq
        %v376 = vand.u32 %v375, 127
        %377 = vset.pattern.permute.xlu0 0
        %378 = vperm.xlu0 %377, %v184
        %v379 = vpop.permute.xlu0 %378
        %380 = vset.pattern.permute.xlu0 0
        %381 = vperm.xlu0 %380, %v185
        %v382 = vpop.permute.xlu0 %381
        %383 = vset.pattern.permute.xlu0 0
        %384 = vperm.xlu0 %383, %v186
        %v385 = vpop.permute.xlu0 %384
        %386 = vset.pattern.permute.xlu0 0
        %387 = vperm.xlu0 %386, %v187
        %v388 = vpop.permute.xlu0 %387
        %389 = vset.pattern.permute.xlu0 0
        %390 = vperm.xlu0 %389, %v188
        %v391 = vpop.permute.xlu0 %390
        %392 = vset.pattern.permute.xlu0 0
        %393 = vperm.xlu0 %392, %v189
        %v394 = vpop.permute.xlu0 %393
        %395 = vset.pattern.permute.xlu0 0
        %396 = vperm.xlu0 %395, %v190
        %v397 = vpop.permute.xlu0 %396
        %398 = vset.pattern.permute.xlu0 0
        %399 = vperm.xlu0 %398, %v191
        %v400 = vpop.permute.xlu0 %399
        %401 = vset.pattern.permute.xlu0 0
        %402 = vperm.xlu0 %401, %v192
        %v403 = vpop.permute.xlu0 %402
        %404 = vset.pattern.permute.xlu0 0
        %405 = vperm.xlu0 %404, %v193
        %v406 = vpop.permute.xlu0 %405
        %407 = vset.pattern.permute.xlu0 0
        %408 = vperm.xlu0 %407, %v194
        %v409 = vpop.permute.xlu0 %408
        %410 = vset.pattern.permute.xlu0 0
        %411 = vperm.xlu0 %410, %v195
        %v412 = vpop.permute.xlu0 %411
        %413 = vset.pattern.permute.xlu0 0
        %414 = vperm.xlu0 %413, %v196
        %v415 = vpop.permute.xlu0 %414
        %416 = vset.pattern.permute.xlu0 0
        %417 = vperm.xlu0 %416, %v197
        %v418 = vpop.permute.xlu0 %417
        %419 = vset.pattern.permute.xlu0 0
        %420 = vperm.xlu0 %419, %v198
        %v421 = vpop.permute.xlu0 %420
        %422 = vset.pattern.permute.xlu0 0
        %423 = vperm.xlu0 %422, %v199
        %v424 = vpop.permute.xlu0 %423
        %425 = vset.pattern.permute.xlu0 0
        %426 = vperm.xlu0 %425, %v200
        %v427 = vpop.permute.xlu0 %426
        %428 = vset.pattern.permute.xlu0 0
        %429 = vperm.xlu0 %428, %v201
        %v430 = vpop.permute.xlu0 %429
        %431 = vset.pattern.permute.xlu0 0
        %432 = vperm.xlu0 %431, %v202
        %v433 = vpop.permute.xlu0 %432
        %vm434 = vcmp.eq.s32.totalorder %v376, %v379
        %vm435 = vcmp.eq.s32.totalorder %v376, %v382
        %vm436 = vcmp.eq.s32.totalorder %v376, %v385
        %vm437 = vcmp.eq.s32.totalorder %v376, %v388
        %vm438 = vcmp.eq.s32.totalorder %v376, %v391
        %vm439 = vcmp.eq.s32.totalorder %v376, %v394
        %vm440 = vcmp.eq.s32.totalorder %v376, %v397
        %vm441 = vcmp.eq.s32.totalorder %v376, %v400
        %vm442 = vcmp.eq.s32.totalorder %v376, %v403
        %vm443 = vcmp.eq.s32.totalorder %v376, %v406
        %vm444 = vcmp.eq.s32.totalorder %v376, %v409
        %vm445 = vcmp.eq.s32.totalorder %v376, %v412
        %vm446 = vcmp.eq.s32.totalorder %v376, %v415
        %vm447 = vcmp.eq.s32.totalorder %v376, %v418
        %vm448 = vcmp.eq.s32.totalorder %v376, %v421
        %vm449 = vcmp.eq.s32.totalorder %v376, %v424
        %vm450 = vcmp.eq.s32.totalorder %v376, %v427
        %vm451 = vcmp.eq.s32.totalorder %v376, %v430
        %vm452 = vcmp.eq.s32.totalorder %v376, %v433
        %v453 = vsel %vm434, %v261, 0.0
        %v454 = vsel %vm435, %v262, 0.0
        %v455 = vsel %vm436, %v263, 0.0
        %v456 = vsel %vm437, %v264, 0.0
        %v457 = vsel %vm438, %v265, 0.0
        %v458 = vsel %vm439, %v266, 0.0
        %v459 = vsel %vm440, %v267, 0.0
        %v460 = vsel %vm441, %v268, 0.0
        %v461 = vsel %vm442, %v269, 0.0
        %v462 = vsel %vm443, %v270, 0.0
        %v463 = vsel %vm444, %v271, 0.0
        %v464 = vsel %vm445, %v272, 0.0
        %v465 = vsel %vm446, %v273, 0.0
        %v466 = vsel %vm447, %v274, 0.0
        %v467 = vsel %vm448, %v275, 0.0
        %v468 = vsel %vm449, %v276, 0.0
        %v469 = vsel %vm450, %v277, 0.0
        %v470 = vsel %vm451, %v278, 0.0
        %v471 = vsel %vm452, %v279, 0.0
        %v472 = vsel %vm203, %v453, 0.0
        %473 = vadd.xlane.f32.xlu0 %v472
        %v474 = vpop.xlane.xlu0 %473
        %v475 = vsel %vm203, %v454, 0.0
        %476 = vadd.xlane.f32.xlu0 %v475
        %v477 = vpop.xlane.xlu0 %476
        %v478 = vsel %vm203, %v455, 0.0
        %479 = vadd.xlane.f32.xlu0 %v478
        %v480 = vpop.xlane.xlu0 %479
        %v481 = vsel %vm203, %v456, 0.0
        %482 = vadd.xlane.f32.xlu0 %v481
        %v483 = vpop.xlane.xlu0 %482
        %v484 = vsel %vm203, %v457, 0.0
        %485 = vadd.xlane.f32.xlu0 %v484
        %v486 = vpop.xlane.xlu0 %485
        %v487 = vsel %vm203, %v458, 0.0
        %488 = vadd.xlane.f32.xlu0 %v487
        %v489 = vpop.xlane.xlu0 %488
        %v490 = vsel %vm203, %v459, 0.0
        %491 = vadd.xlane.f32.xlu0 %v490
        %v492 = vpop.xlane.xlu0 %491
        %v493 = vsel %vm203, %v460, 0.0
        %494 = vadd.xlane.f32.xlu0 %v493
        %v495 = vpop.xlane.xlu0 %494
        %v496 = vsel %vm203, %v461, 0.0
        %497 = vadd.xlane.f32.xlu0 %v496
        %v498 = vpop.xlane.xlu0 %497
        %v499 = vsel %vm203, %v462, 0.0
        %500 = vadd.xlane.f32.xlu0 %v499
        %v501 = vpop.xlane.xlu0 %500
        %v502 = vsel %vm203, %v463, 0.0
        %503 = vadd.xlane.f32.xlu0 %v502
        %v504 = vpop.xlane.xlu0 %503
        %v505 = vsel %vm203, %v464, 0.0
        %506 = vadd.xlane.f32.xlu0 %v505
        %v507 = vpop.xlane.xlu0 %506
        %v508 = vsel %vm203, %v465, 0.0
        %509 = vadd.xlane.f32.xlu0 %v508
        %v510 = vpop.xlane.xlu0 %509
        %v511 = vsel %vm203, %v466, 0.0
        %512 = vadd.xlane.f32.xlu0 %v511
        %v513 = vpop.xlane.xlu0 %512
        %v514 = vsel %vm203, %v467, 0.0
        %515 = vadd.xlane.f32.xlu0 %v514
        %v516 = vpop.xlane.xlu0 %515
        %v517 = vsel %vm203, %v468, 0.0
        %518 = vadd.xlane.f32.xlu0 %v517
        %v519 = vpop.xlane.xlu0 %518
        %v520 = vsel %vm203, %v469, 0.0
        %521 = vadd.xlane.f32.xlu0 %v520
        %v522 = vpop.xlane.xlu0 %521
        %v523 = vsel %vm203, %v470, 0.0
        %524 = vadd.xlane.f32.xlu0 %v523
        %v525 = vpop.xlane.xlu0 %524
        %v526 = vsel %vm203, %v471, 0.0
        %527 = vadd.xlane.f32.xlu0 %v526
        %v528 = vpop.xlane.xlu0 %527
        %v529 = vlog2.pop %v320
        %v530 = vmul.f32 %v529, 0.6931472
        %v531 = vlog2.pop %v323
        %v532 = vmul.f32 %v531, 0.6931472
        %v533 = vlog2.pop %v326
        %v534 = vmul.f32 %v533, 0.6931472
        %v535 = vlog2.pop %v329
        %v536 = vmul.f32 %v535, 0.6931472
        %v537 = vlog2.pop %v332
        %v538 = vmul.f32 %v537, 0.6931472
        %v539 = vlog2.pop %v335
        %v540 = vmul.f32 %v539, 0.6931472
        %v541 = vlog2.pop %v338
        %v542 = vmul.f32 %v541, 0.6931472
        %v543 = vlog2.pop %v341
        %v544 = vmul.f32 %v543, 0.6931472
        %v545 = vlog2.pop %v344
        %v546 = vmul.f32 %v545, 0.6931472
        %v547 = vlog2.pop %v347
        %v548 = vmul.f32 %v547, 0.6931472
        %v549 = vlog2.pop %v350
        %v550 = vmul.f32 %v549, 0.6931472
        %v551 = vlog2.pop %v353
        %v552 = vmul.f32 %v551, 0.6931472
        %v553 = vlog2.pop %v356
        %v554 = vmul.f32 %v553, 0.6931472
        %v555 = vlog2.pop %v359
        %v556 = vmul.f32 %v555, 0.6931472
        %v557 = vlog2.pop %v362
        %v558 = vmul.f32 %v557, 0.6931472
        %v559 = vlog2.pop %v365
        %v560 = vmul.f32 %v559, 0.6931472
        %v561 = vlog2.pop %v368
        %v562 = vmul.f32 %v561, 0.6931472
        %v563 = vlog2.pop %v371
        %v564 = vmul.f32 %v563, 0.6931472
        %v565 = vlog2.pop %v374
        %v566 = vmul.f32 %v565, 0.6931472
        %v567 = vsub.f32 %v530, %v474
        %v568 = vsub.f32 %v532, %v477
        %v569 = vsub.f32 %v534, %v480
        %v570 = vsub.f32 %v536, %v483
        %v571 = vsub.f32 %v538, %v486
        %v572 = vsub.f32 %v540, %v489
        %v573 = vsub.f32 %v542, %v492
        %v574 = vsub.f32 %v544, %v495
        %v575 = vsub.f32 %v546, %v498
        %v576 = vsub.f32 %v548, %v501
        %v577 = vsub.f32 %v550, %v504
        %v578 = vsub.f32 %v552, %v507
        %v579 = vsub.f32 %v554, %v510
        %v580 = vsub.f32 %v556, %v513
        %v581 = vsub.f32 %v558, %v516
        %v582 = vsub.f32 %v560, %v519
        %v583 = vsub.f32 %v562, %v522
        %v584 = vsub.f32 %v564, %v525
        %v585 = vsub.f32 %v566, %v528
        %v586 = vsub.f32 0.0, %v567
        %v587 = vsub.f32 0.0, %v568
        %v588 = vsub.f32 0.0, %v569
        %v589 = vsub.f32 0.0, %v570
        %v590 = vsub.f32 0.0, %v571
        %v591 = vsub.f32 0.0, %v572
        %v592 = vsub.f32 0.0, %v573
        %v593 = vsub.f32 0.0, %v574
        %v594 = vsub.f32 0.0, %v575
        %v595 = vsub.f32 0.0, %v576
        %v596 = vsub.f32 0.0, %v577
        %v597 = vsub.f32 0.0, %v578
        %v598 = vsub.f32 0.0, %v579
        %v599 = vsub.f32 0.0, %v580
        %v600 = vsub.f32 0.0, %v581
        %v601 = vsub.f32 0.0, %v582
        %v602 = vsub.f32 0.0, %v583
        %v603 = vsub.f32 0.0, %v584
        %v604 = vsub.f32 0.0, %v585
        %v605 = vmul.f32 %v586, 1.442695
        %v606 = vpow.pop %v605
        %v607 = vmul.f32 %v587, 1.442695
        %v608 = vpow.pop %v607
        %v609 = vmul.f32 %v588, 1.442695
        %v610 = vpow.pop %v609
        %v611 = vmul.f32 %v589, 1.442695
        %v612 = vpow.pop %v611
        %v613 = vmul.f32 %v590, 1.442695
        %v614 = vpow.pop %v613
        %v615 = vmul.f32 %v591, 1.442695
        %v616 = vpow.pop %v615
        %v617 = vmul.f32 %v592, 1.442695
        %v618 = vpow.pop %v617
        %v619 = vmul.f32 %v593, 1.442695
        %v620 = vpow.pop %v619
        %v621 = vmul.f32 %v594, 1.442695
        %v622 = vpow.pop %v621
        %v623 = vmul.f32 %v595, 1.442695
        %v624 = vpow.pop %v623
        %v625 = vmul.f32 %v596, 1.442695
        %v626 = vpow.pop %v625
        %v627 = vmul.f32 %v597, 1.442695
        %v628 = vpow.pop %v627
        %v629 = vmul.f32 %v598, 1.442695
        %v630 = vpow.pop %v629
        %v631 = vmul.f32 %v599, 1.442695
        %v632 = vpow.pop %v631
        %v633 = vmul.f32 %v600, 1.442695
        %v634 = vpow.pop %v633
        %v635 = vmul.f32 %v601, 1.442695
        %v636 = vpow.pop %v635
        %v637 = vmul.f32 %v602, 1.442695
        %v638 = vpow.pop %v637
        %v639 = vmul.f32 %v603, 1.442695
        %v640 = vpow.pop %v639
        %v641 = vmul.f32 %v604, 1.442695
        %v642 = vpow.pop %v641
        %v643 = vsub.f32 1.0, %v606
        %v644 = vsub.f32 1.0, %v608
        %v645 = vsub.f32 1.0, %v610
        %v646 = vsub.f32 1.0, %v612
        %v647 = vsub.f32 1.0, %v614
        %v648 = vsub.f32 1.0, %v616
        %v649 = vsub.f32 1.0, %v618
        %v650 = vsub.f32 1.0, %v620
        %v651 = vsub.f32 1.0, %v622
        %v652 = vsub.f32 1.0, %v624
        %v653 = vsub.f32 1.0, %v626
        %v654 = vsub.f32 1.0, %v628
        %v655 = vsub.f32 1.0, %v630
        %v656 = vsub.f32 1.0, %v632
        %v657 = vsub.f32 1.0, %v634
        %v658 = vsub.f32 1.0, %v636
        %v659 = vsub.f32 1.0, %v638
        %v660 = vsub.f32 1.0, %v640
        %v661 = vsub.f32 1.0, %v642
        %v662 = vmax.f32 %v643, 0.0
        %v663 = vmax.f32 %v644, 0.0
        %v664 = vmax.f32 %v645, 0.0
        %v665 = vmax.f32 %v646, 0.0
        %v666 = vmax.f32 %v647, 0.0
        %v667 = vmax.f32 %v648, 0.0
        %v668 = vmax.f32 %v649, 0.0
        %v669 = vmax.f32 %v650, 0.0
        %v670 = vmax.f32 %v651, 0.0
        %v671 = vmax.f32 %v652, 0.0
        %v672 = vmax.f32 %v653, 0.0
        %v673 = vmax.f32 %v654, 0.0
        %v674 = vmax.f32 %v655, 0.0
        %v675 = vmax.f32 %v656, 0.0
        %v676 = vmax.f32 %v657, 0.0
        %v677 = vmax.f32 %v658, 0.0
        %v678 = vmax.f32 %v659, 0.0
        %v679 = vmax.f32 %v660, 0.0
        %v680 = vmax.f32 %v661, 0.0
        %v681 = vmul.f32 %v662, %v662
        %v682 = vmul.f32 %v663, %v663
        %v683 = vmul.f32 %v664, %v664
        %v684 = vmul.f32 %v665, %v665
        %v685 = vmul.f32 %v666, %v666
        %v686 = vmul.f32 %v667, %v667
        %v687 = vmul.f32 %v668, %v668
        %v688 = vmul.f32 %v669, %v669
        %v689 = vmul.f32 %v670, %v670
        %v690 = vmul.f32 %v671, %v671
        %v691 = vmul.f32 %v672, %v672
        %v692 = vmul.f32 %v673, %v673
        %v693 = vmul.f32 %v674, %v674
        %v694 = vmul.f32 %v675, %v675
        %v695 = vmul.f32 %v676, %v676
        %v696 = vmul.f32 %v677, %v677
        %v697 = vmul.f32 %v678, %v678
        %v698 = vmul.f32 %v679, %v679
        %v699 = vmul.f32 %v680, %v680
        %v700 = vmul.f32 %v681, %v567
        %v701 = vmul.f32 %v682, %v568
        %v702 = vmul.f32 %v683, %v569
        %v703 = vmul.f32 %v684, %v570
        %v704 = vmul.f32 %v685, %v571
        %v705 = vmul.f32 %v686, %v572
        %v706 = vmul.f32 %v687, %v573
        %v707 = vmul.f32 %v688, %v574
        %v708 = vmul.f32 %v689, %v575
        %v709 = vmul.f32 %v690, %v576
        %v710 = vmul.f32 %v691, %v577
        %v711 = vmul.f32 %v692, %v578
        %v712 = vmul.f32 %v693, %v579
        %v713 = vmul.f32 %v694, %v580
        %v714 = vmul.f32 %v695, %v581
        %v715 = vmul.f32 %v696, %v582
        %v716 = vmul.f32 %v697, %v583
        %v717 = vmul.f32 %v698, %v584
        %v718 = vmul.f32 %v699, %v585
        %s719 = smul.u32 %s16, 152
        %v720 = vlaneseq
        %v721 = vshrl.u32 %v720, 7
        %v722 = vadd.s32 %v721, 8
        %v723 = vadd.s32 %v721, 16
        %v724 = vadd.s32 %v721, 24
        %v725 = vadd.s32 %v721, 32
        %v726 = vadd.s32 %v721, 40
        %v727 = vadd.s32 %v721, 48
        %v728 = vadd.s32 %v721, 56
        %v729 = vadd.s32 %v721, 64
        %v730 = vadd.s32 %v721, 72
        %v731 = vadd.s32 %v721, 80
        %v732 = vadd.s32 %v721, 88
        %v733 = vadd.s32 %v721, 96
        %v734 = vadd.s32 %v721, 104
        %v735 = vadd.s32 %v721, 112
        %v736 = vadd.s32 %v721, 120
        %v737 = vadd.s32 %v721, 128
        %v738 = vadd.s32 %v721, 136
        %v739 = vadd.s32 %v721, 144
        %v740 = vstv %s719
        %v741 = vadd.s32 %v740, %v721
        %v742 = vadd.s32 %v740, %v722
        %v743 = vadd.s32 %v740, %v723
        %v744 = vadd.s32 %v740, %v724
        %v745 = vadd.s32 %v740, %v725
        %v746 = vadd.s32 %v740, %v726
        %v747 = vadd.s32 %v740, %v727
        %v748 = vadd.s32 %v740, %v728
        %v749 = vadd.s32 %v740, %v729
        %v750 = vadd.s32 %v740, %v730
        %v751 = vadd.s32 %v740, %v731
        %v752 = vadd.s32 %v740, %v732
        %v753 = vadd.s32 %v740, %v733
        %v754 = vadd.s32 %v740, %v734
        %v755 = vadd.s32 %v740, %v735
        %v756 = vadd.s32 %v740, %v736
        %v757 = vadd.s32 %v740, %v737
        %v758 = vadd.s32 %v740, %v738
        %v759 = vadd.s32 %v740, %v739
        %vm760 = vcmp.lt.s32.totalorder %v741, 300
        %vm761 = vcmp.lt.s32.totalorder %v742, 300
        %vm762 = vcmp.lt.s32.totalorder %v743, 300
        %vm763 = vcmp.lt.s32.totalorder %v744, 300
        %vm764 = vcmp.lt.s32.totalorder %v745, 300
        %vm765 = vcmp.lt.s32.totalorder %v746, 300
        %vm766 = vcmp.lt.s32.totalorder %v747, 300
        %vm767 = vcmp.lt.s32.totalorder %v748, 300
        %vm768 = vcmp.lt.s32.totalorder %v749, 300
        %vm769 = vcmp.lt.s32.totalorder %v750, 300
        %vm770 = vcmp.lt.s32.totalorder %v751, 300
        %vm771 = vcmp.lt.s32.totalorder %v752, 300
        %vm772 = vcmp.lt.s32.totalorder %v753, 300
        %vm773 = vcmp.lt.s32.totalorder %v754, 300
        %vm774 = vcmp.lt.s32.totalorder %v755, 300
        %vm775 = vcmp.lt.s32.totalorder %v756, 300
        %vm776 = vcmp.lt.s32.totalorder %v757, 300
        %vm777 = vcmp.lt.s32.totalorder %v758, 300
        %vm778 = vcmp.lt.s32.totalorder %v759, 300
        %v779 = vsel %vm760, %v700, 0.0
        %v780 = vsel %vm761, %v701, 0.0
        %v781 = vsel %vm762, %v702, 0.0
        %v782 = vsel %vm763, %v703, 0.0
        %v783 = vsel %vm764, %v704, 0.0
        %v784 = vsel %vm765, %v705, 0.0
        %v785 = vsel %vm766, %v706, 0.0
        %v786 = vsel %vm767, %v707, 0.0
        %v787 = vsel %vm768, %v708, 0.0
        %v788 = vsel %vm769, %v709, 0.0
        %v789 = vsel %vm770, %v710, 0.0
        %v790 = vsel %vm771, %v711, 0.0
        %v791 = vsel %vm772, %v712, 0.0
        %v792 = vsel %vm773, %v713, 0.0
        %v793 = vsel %vm774, %v714, 0.0
        %v794 = vsel %vm775, %v715, 0.0
        %v795 = vsel %vm776, %v716, 0.0
        %v796 = vsel %vm777, %v717, 0.0
        %v797 = vsel %vm778, %v718, 0.0
        %vm798 = vcmask 7168
        %v799 = vsel %vm798, %v779, 0.0
        %v800 = vsel %vm798, %v780, 0.0
        %v801 = vadd.f32 %v799, %v800
        %v802 = vsel %vm798, %v781, 0.0
        %v803 = vadd.f32 %v801, %v802
        %v804 = vsel %vm798, %v782, 0.0
        %v805 = vadd.f32 %v803, %v804
        %v806 = vsel %vm798, %v783, 0.0
        %v807 = vadd.f32 %v805, %v806
        %v808 = vsel %vm798, %v784, 0.0
        %v809 = vadd.f32 %v807, %v808
        %v810 = vsel %vm798, %v785, 0.0
        %v811 = vadd.f32 %v809, %v810
        %v812 = vsel %vm798, %v786, 0.0
        %v813 = vadd.f32 %v811, %v812
        %v814 = vsel %vm798, %v787, 0.0
        %v815 = vadd.f32 %v813, %v814
        %v816 = vsel %vm798, %v788, 0.0
        %v817 = vadd.f32 %v815, %v816
        %v818 = vsel %vm798, %v789, 0.0
        %v819 = vadd.f32 %v817, %v818
        %v820 = vsel %vm798, %v790, 0.0
        %v821 = vadd.f32 %v819, %v820
        %v822 = vsel %vm798, %v791, 0.0
        %v823 = vadd.f32 %v821, %v822
        %v824 = vsel %vm798, %v792, 0.0
        %v825 = vadd.f32 %v823, %v824
        %v826 = vsel %vm798, %v793, 0.0
        %v827 = vadd.f32 %v825, %v826
        %v828 = vsel %vm798, %v794, 0.0
        %v829 = vadd.f32 %v827, %v828
        %v830 = vsel %vm798, %v795, 0.0
        %v831 = vadd.f32 %v829, %v830
        %v832 = vsel %vm798, %v796, 0.0
        %v833 = vadd.f32 %v831, %v832
        %v834 = vsel %vm798, %v797, 0.0
        %v835 = vadd.f32 %v833, %v834
        %836 = vadd.xlane.f32.xlu0 %v835
        %v837 = vpop.xlane.xlu0 %836
        %v838 = vrot.slane %v837, 4
        %v839 = vadd.f32 %v837, %v838
        %v840 = vrot.slane %v839, 2
        %v841 = vadd.f32 %v839, %v840
        %v842 = vrot.slane %v841, 1
        %v843 = vadd.f32 %v841, %v842
        %s844 = vtos %v843
        %v845 = vstv %s844
        %846 = vst [vmem:[%s152] sm:$0x1] %v845
        %s847 = sand.u32 %s76, 1
        %s848 = scalar_lea.sflag [#allocation3], %s847
        %s849 = sand.u32 %s76, 1
        %s850 = scalar_lea.vmem [#allocation2], %s849
        // Predicated region
        $region29: #{tpu_custom_call.1} parent=27 // pred_check
          %p851 = pneg %p86
        $region30: #{tpu_custom_call.1} parent=27 // pred_check_branch
          %853 = sbr.rel (%p851) target = $region32
        $region31: #{tpu_custom_call.1} parent=27 // pred_region
          %s855 = ssub.s32 16, 16
          %856 = vsyncadd %s848, %s855
          %s857 = smul.addr %s16, 16
          %s858 = scalar_lea.hbm %s2, %s857
          %s860 = sshll.u32 %s850, 4
          %s861 = int_to_ptr.vmem [resolvable:$true] %s860
          %863 = dma.vmem_to_hbm [thread:$0]  %s861, 16, %s858, %s848
        $region32: #{tpu_custom_call.1} parent=27 // pred_fallthru
          _
      $region28: #{tpu_custom_call.1} parent=5 // pred_fallthru
        _
      %p864 = scmp.le.s32.totalorder 2, %s11
      // Predicated region
      $region33: #{tpu_custom_call.1} parent=5 // pred_check
        %p865 = pneg %p864
      $region34: #{tpu_custom_call.1} parent=5 // pred_check_branch
        %867 = sbr.rel (%p865) target = $region36
      $region35: #{tpu_custom_call.1} parent=5 // pred_region
        %s868 = ssub.s32 %s11, 2
        // Predicated region
        $region37: #{tpu_custom_call.1} parent=35 // pred_check
          %p869 = pneg %p92
        $region38: #{tpu_custom_call.1} parent=35 // pred_check_branch
          %871 = sbr.rel (%p869) target = $region40
        $region39: #{tpu_custom_call.1} parent=35 // pred_region
          %s872 = sand.u32 %s77, 1
          %s873 = scalar_lea.sflag [#allocation3], %s872
          %s874 = sand.u32 %s77, 1
          %s875 = scalar_lea.vmem [#allocation2], %s874
          %876 = dma.done %s873, 16
        $region40: #{tpu_custom_call.1} parent=35 // pred_fallthru
          _
      $region36: #{tpu_custom_call.1} parent=5 // pred_fallthru
        _
    $region6: #{tpu_custom_call.1} parent=1 // loop_footer
      %s15 = sadd.s32 1, %s11
    $region7: #{tpu_custom_call.1} parent=1 // loop_footer_branch
      %10 = sbr.rel target = $region3
    $region8: #{tpu_custom_call.1} parent=1 // loop_exit
      _
    %877 = vsyncpa [#allocation3], 1
    %s878 = scalar_lea.sflag [#allocation3], 1
    %879 = vsyncpa %s878, 1

</llo_original>
